<compile_context>
chip_gen: v6e
topology: v6e:2x2x1
jax: 0.10.0
libtpu: 0.0.40
codegen_flags: <defaults>
</compile_context>

<pallas_src>
import functools

import jax
import jax.numpy as jnp
from jax import lax
from jax.experimental import pallas as pl
from jax.experimental.pallas import tpu as pltpu


def _fused_gather_head_kernel(
    # scalar-prefetch refs (SMEM)
    did_ref, gid_ref,
    # inputs
    dom_hbm, go_hbm, w1_ref, b1_ref, w2_ref, b2_ref,
    # output
    o_ref,
    # scratch
    dbuf, gbuf, sem,
    *, tile_rows, batch, use_bf16):
  """Fused: HBM row gather -> max_norm renorm -> mul -> MLP head -> sigmoid."""
  i = pl.program_id(0)
  base = i * tile_rows
  # Number of real (non-padded) rows in this batch tile.
  n = jnp.minimum(tile_rows, batch - base)

  # ---- fused embedding gather: one HBM-row DMA per (row, table) ----
  @pl.loop(0, n)
  def _issue(r):
    d_id = did_ref[base + r]
    g_id = gid_ref[base + r]
    pltpu.make_async_copy(dom_hbm.at[d_id], dbuf.at[r], sem.at[0]).start()
    pltpu.make_async_copy(go_hbm.at[g_id], gbuf.at[r], sem.at[1]).start()

  @pl.loop(0, n)
  def _wait(r):
    # Same-sized copies share the semaphore; wait once per issued copy.
    pltpu.make_async_copy(dom_hbm.at[0], dbuf.at[r], sem.at[0]).wait()
    pltpu.make_async_copy(go_hbm.at[0], gbuf.at[r], sem.at[1]).wait()

  d = dbuf[...]   # [TB, Ep] f32 (padded rows hold don't-care data)
  g = gbuf[...]   # [TB, Ep] f32

  # torch.nn.Embedding(max_norm=1): only rows with norm > 1 are rescaled.
  # torch divides by (norm + 1e-7); rsqrt matches it to <1e-7 relative error.
  d_ss = jnp.sum(d * d, axis=-1, keepdims=True)
  d = d * jnp.where(d_ss > 1.0, lax.rsqrt(d_ss), 1.0)
  g_ss = jnp.sum(g * g, axis=-1, keepdims=True)
  g = g * jnp.where(g_ss > 1.0, lax.rsqrt(g_ss), 1.0)

  feat = d * g
  if use_bf16:
    feat = feat.astype(jnp.bfloat16)       # MXU-native operands, f32 accumulate

  # Linear(emb_dim, latent_dim) + ReLU   (Dropout is identity at inference)
  h = jnp.dot(feat, w1_ref[...], preferred_element_type=jnp.float32)
  h = jnp.maximum(h + b1_ref[...], 0.0)

  # Linear(latent_dim, 1) + Sigmoid: width-1 matmul done as VPU mul + reduce.
  logits = jnp.sum(h * w2_ref[...], axis=-1, keepdims=True) + b2_ref[0, 0]
  o_ref[...] = jax.nn.sigmoid(logits)


def _round_up(x, m):
  return ((x + m - 1) // m) * m


def domain_embedding_forward(domain_id, go_id, params, *,
                             tile_rows=256, use_bf16=True):
  """predict_head(embedding_domain(domain_id) * embedding_go(go_id))."""
  emb_d = params["embedding_domain"]     # [num_domains, E]
  emb_g = params["embedding_go"]         # [num_goterms, E]
  w1, b1 = params["w1"], params["b1"]    # [E, L], [1, L]
  w2, b2 = params["w2"], params["b2"]    # [L, 1], [1, 1]

  B = int(domain_id.shape[0])
  E = int(emb_d.shape[1])
  L = int(w1.shape[1])

  # Lane-dense padding: pad E and L up to multiples of 128.  Zero pads keep
  # the math identical (padded embedding columns are 0; padded w2 rows are 0).
  Ep = _round_up(E, 128)
  Lp = _round_up(L, 128)
  if Ep != E:
    emb_d = jnp.pad(emb_d, ((0, 0), (0, Ep - E)))
    emb_g = jnp.pad(emb_g, ((0, 0), (0, Ep - E)))
    w1 = jnp.pad(w1, ((0, Ep - E), (0, 0)))
  if Lp != L:
    w1 = jnp.pad(w1, ((0, 0), (0, Lp - L)))
    b1 = jnp.pad(b1, ((0, 0), (0, Lp - L)))
    w2 = jnp.pad(w2, ((0, Lp - L), (0, 0)))
  w2_row = w2.reshape(1, Lp)

  if use_bf16:
    w1 = w1.astype(jnp.bfloat16)

  # Batch tiling: one grid step per TB rows (keeps VMEM bounded and the number
  # of in-flight row DMAs per step modest).
  if B <= tile_rows:
    TB = max(8, _round_up(B, 8))
  else:
    TB = _round_up(tile_rows, 8)
  Bp = _round_up(B, TB)
  num_tiles = Bp // TB

  did = jnp.pad(domain_id.astype(jnp.int32), (0, Bp - B))
  gid = jnp.pad(go_id.astype(jnp.int32), (0, Bp - B))

  kernel = functools.partial(
      _fused_gather_head_kernel,
      tile_rows=TB, batch=B, use_bf16=use_bf16)

  grid_spec = pltpu.PrefetchScalarGridSpec(
      num_scalar_prefetch=2,
      grid=(num_tiles,),
      in_specs=[
          pl.BlockSpec(memory_space=pl.ANY),                       # domain table (HBM)
          pl.BlockSpec(memory_space=pl.ANY),                       # go table (HBM)
          pl.BlockSpec((Ep, Lp), lambda i, dids, gids: (0, 0)),    # w1 (resident)
          pl.BlockSpec((1, Lp), lambda i, dids, gids: (0, 0)),     # b1
          pl.BlockSpec((1, Lp), lambda i, dids, gids: (0, 0)),     # w2 row
          pl.BlockSpec(memory_space=pltpu.MemorySpace.SMEM),       # b2 scalar
      ],
      out_specs=pl.BlockSpec((TB, 1), lambda i, dids, gids: (i, 0)),
      scratch_shapes=[
          pltpu.VMEM((TB, Ep), jnp.float32),       # gathered domain rows
          pltpu.VMEM((TB, Ep), jnp.float32),       # gathered GO rows
          pltpu.SemaphoreType.DMA((2,)),
      ],
  )

  out = pl.pallas_call(
      kernel,
      out_shape=jax.ShapeDtypeStruct((Bp, 1), jnp.float32),
      grid_spec=grid_spec,
      compiler_params=pltpu.CompilerParams(
          dimension_semantics=("parallel",)),
  )(did, gid, emb_d, emb_g, w1, b1, w2_row, b2)

  return out[:B, 0]   # .squeeze(1)


def _reference_forward(domain_id, go_id, params, *, use_bf16=False):
  """Pure-JAX reference with torch max_norm semantics."""
  d = jnp.take(params["embedding_domain"], domain_id, axis=0)
  g = jnp.take(params["embedding_go"], go_id, axis=0)
  dn = jnp.linalg.norm(d, axis=-1, keepdims=True)
  d = jnp.where(dn > 1.0, d / (dn + 1e-7), d)
  gn = jnp.linalg.norm(g, axis=-1, keepdims=True)
  g = jnp.where(gn > 1.0, g / (gn + 1e-7), g)
  feat = d * g
  w1 = params["w1"]
  if use_bf16:
    feat = feat.astype(jnp.bfloat16)
    w1 = w1.astype(jnp.bfloat16)
  h = jnp.dot(feat, w1, preferred_element_type=jnp.float32) + params["b1"]
  h = jnp.maximum(h, 0.0)
  return jax.nn.sigmoid(h @ params["w2"] + params["b2"])[:, 0]


def init_params(key, num_domains, num_goterms, emb_dim, latent_dim):
  k0, k1, k2, k3, k4, k5 = jax.random.split(key, 6)
  # torch.nn.Embedding init: N(0, 1)
  embedding_domain = jax.random.normal(k0, (num_domains, emb_dim), jnp.float32)
  embedding_go = jax.random.normal(k1, (num_goterms, emb_dim), jnp.float32)
  # nn.Linear init: U(-1/sqrt(fan_in), 1/sqrt(fan_in)); stored as [in, out].
  lim1 = 1.0 / (emb_dim ** 0.5)
  w1 = jax.random.uniform(k2, (emb_dim, latent_dim), jnp.float32, -lim1, lim1)
  b1 = jax.random.uniform(k3, (1, latent_dim), jnp.float32, -lim1, lim1)
  lim2 = 1.0 / (latent_dim ** 0.5)
  w2 = jax.random.uniform(k4, (latent_dim, 1), jnp.float32, -lim2, lim2)
  b2 = jax.random.uniform(k5, (1, 1), jnp.float32, -lim2, lim2)
  # TODO(synk): Projector / contrastive-loss branch and `temp` only run when
  # all_loss is passed (training path); not part of the plain forward output.
  return dict(embedding_domain=embedding_domain, embedding_go=embedding_go,
              w1=w1, b1=b1, w2=w2, b2=b2)


if __name__ == "__main__":
  # Small shapes consistent with the module (emb_dim/latent_dim = defaults).
  num_domains, num_goterms = 10, 12
  emb_dim, latent_dim = 256, 128
  batch = 8

  key = jax.random.PRNGKey(0)
  kp, kd, kg = jax.random.split(key, 3)
  params = init_params(kp, num_domains, num_goterms, emb_dim, latent_dim)

  domain_id = jax.random.randint(kd, (batch,), 0, num_domains, jnp.int32)
  go_id = jax.random.randint(kg, (batch,), 0, num_goterms, jnp.int32)

  out = domain_embedding_forward(domain_id, go_id, params)
  out = jax.block_until_ready(out)
  assert out.shape == (batch,)

  # Tight check against a bf16-matmul-matched reference; loose check against
  # the full-f32 torch-faithful reference (bounds the bf16 cast error).
  ref_bf16 = _reference_forward(domain_id, go_id, params, use_bf16=True)
  ref_f32 = _reference_forward(domain_id, go_id, params, use_bf16=False)
  assert jnp.allclose(out, ref_bf16, atol=1e-4, rtol=1e-4), (out, ref_bf16)
  assert jnp.allclose(out, ref_f32, atol=1e-2, rtol=1e-2), (out, ref_f32)

  print("KERNEL_OK")
</pallas_src>

<mosaic_0001>
module attributes {stable_mosaic.version = 11 : i64} {
  func.func @_fused_gather_head_kernel(%arg0: i32, %arg1: memref<8xi32, #tpu.memory_space<smem>>, %arg2: memref<8xi32, #tpu.memory_space<smem>>, %arg3: memref<10x256xf32, #tpu.memory_space<any>>, %arg4: memref<12x256xf32, #tpu.memory_space<any>>, %arg5: memref<256x128xbf16, #tpu.memory_space<vmem>>, %arg6: memref<1x128xf32, #tpu.memory_space<vmem>>, %arg7: memref<1x128xf32, #tpu.memory_space<vmem>>, %arg8: memref<1x1xf32, #tpu.memory_space<smem>>, %arg9: memref<8x1xf32, #tpu.memory_space<vmem>>, %arg10: memref<8x256xf32, #tpu.memory_space<vmem>>, %arg11: memref<8x256xf32, #tpu.memory_space<vmem>>, %arg12: memref<2x!tpu.dma_semaphore, #tpu.memory_space<semaphore_mem>>) attributes {dimension_semantics = [#tpu.dimension_semantics<parallel>], iteration_bounds = array<i64: 1>, scalar_prefetch = 2 : i64, scratch_operands = 3 : i64, tpu.core_type = #tpu.core_type<tc>, window_params = [{}, {}, {pipeline_mode = #tpu.pipeline_mode<synchronous>, transform_indices = @transform_2, window_bounds = array<i64: 256, 128>}, {pipeline_mode = #tpu.pipeline_mode<synchronous>, transform_indices = @transform_3, window_bounds = array<i64: 1, 128>}, {pipeline_mode = #tpu.pipeline_mode<synchronous>, transform_indices = @transform_4, window_bounds = array<i64: 1, 128>}, {transform_indices = @transform_5, window_bounds = array<i64: 1, 1>}, {transform_indices = @transform_6, window_bounds = array<i64: 8, 1>}]} {
    %c8_i32 = arith.constant 8 : i32
    %0 = arith.muli %arg0, %c8_i32 : i32
    %c8_i32_0 = arith.constant 8 : i32
    %1 = arith.subi %c8_i32_0, %0 : i32
    %c8_i32_1 = arith.constant 8 : i32
    %2 = arith.minsi %c8_i32_1, %1 : i32
    %c0_i32 = arith.constant 0 : i32
    %3 = arith.subi %2, %c0_i32 : i32
    %c1_i32 = arith.constant 1 : i32
    %c1_i32_2 = arith.constant 1 : i32
    %4 = arith.subi %c1_i32, %c1_i32_2 : i32
    %5 = arith.addi %3, %4 : i32
    %c1_i32_3 = arith.constant 1 : i32
    %6 = arith.divsi %5, %c1_i32_3 : i32
    %c1_i32_4 = arith.constant 1 : i32
    %c0_i32_5 = arith.constant 0 : i32
    %c0_i32_6 = arith.constant 0 : i32
    %7 = arith.subi %6, %c0_i32_6 : i32
    %8 = arith.addi %c0_i32_6, %7 : i32
    %c1_i32_7 = arith.constant 1 : i32
    scf.for %arg13 = %c0_i32_6 to %8 step %c1_i32_7  : i32 {
      %60 = arith.muli %arg13, %c1_i32_4 : i32
      %61 = arith.addi %c0_i32_5, %60 : i32
      %62 = arith.addi %0, %61 : i32
      %63 = arith.index_cast %62 : i32 to index
      %64 = memref.load %arg1[%63] : memref<8xi32, #tpu.memory_space<smem>>
      %65 = arith.addi %0, %61 : i32
      %66 = arith.index_cast %65 : i32 to index
      %67 = memref.load %arg2[%66] : memref<8xi32, #tpu.memory_space<smem>>
      %c0_i32_38 = arith.constant 0 : i32
      %c0_i32_39 = arith.constant 0 : i32
      %68 = tpu.memref_slice %arg3[%64, %c0_i32_39] : memref<10x256xf32, #tpu.memory_space<any>> -> memref<1x256xf32, #tpu.memory_space<any>>
      %69 = tpu.memref_squeeze %68 : memref<1x256xf32, #tpu.memory_space<any>> -> memref<256xf32, #tpu.memory_space<any>>
      %c0_i32_40 = arith.constant 0 : i32
      %70 = tpu.memref_slice %arg10[%61, %c0_i32_40] : memref<8x256xf32, #tpu.memory_space<vmem>> -> memref<1x256xf32, #tpu.memory_space<vmem>>
      %71 = tpu.memref_squeeze %70 : memref<1x256xf32, #tpu.memory_space<vmem>> -> memref<256xf32, #tpu.memory_space<vmem>>
      %72 = tpu.memref_slice %arg12[%c0_i32_38] : memref<2x!tpu.dma_semaphore, #tpu.memory_space<semaphore_mem>> -> memref<1x!tpu.dma_semaphore, #tpu.memory_space<semaphore_mem>>
      %73 = tpu.memref_squeeze %72 : memref<1x!tpu.dma_semaphore, #tpu.memory_space<semaphore_mem>> -> memref<!tpu.dma_semaphore, #tpu.memory_space<semaphore_mem>>
      tpu.enqueue_dma source(%69 : memref<256xf32, #tpu.memory_space<any>>) target(%71 : memref<256xf32, #tpu.memory_space<vmem>>) target_semaphore(%73 : memref<!tpu.dma_semaphore, #tpu.memory_space<semaphore_mem>>)
      %c1_i32_41 = arith.constant 1 : i32
      %c0_i32_42 = arith.constant 0 : i32
      %74 = tpu.memref_slice %arg4[%67, %c0_i32_42] : memref<12x256xf32, #tpu.memory_space<any>> -> memref<1x256xf32, #tpu.memory_space<any>>
      %75 = tpu.memref_squeeze %74 : memref<1x256xf32, #tpu.memory_space<any>> -> memref<256xf32, #tpu.memory_space<any>>
      %c0_i32_43 = arith.constant 0 : i32
      %76 = tpu.memref_slice %arg11[%61, %c0_i32_43] : memref<8x256xf32, #tpu.memory_space<vmem>> -> memref<1x256xf32, #tpu.memory_space<vmem>>
      %77 = tpu.memref_squeeze %76 : memref<1x256xf32, #tpu.memory_space<vmem>> -> memref<256xf32, #tpu.memory_space<vmem>>
      %78 = tpu.memref_slice %arg12[%c1_i32_41] : memref<2x!tpu.dma_semaphore, #tpu.memory_space<semaphore_mem>> -> memref<1x!tpu.dma_semaphore, #tpu.memory_space<semaphore_mem>>
      %79 = tpu.memref_squeeze %78 : memref<1x!tpu.dma_semaphore, #tpu.memory_space<semaphore_mem>> -> memref<!tpu.dma_semaphore, #tpu.memory_space<semaphore_mem>>
      tpu.enqueue_dma source(%75 : memref<256xf32, #tpu.memory_space<any>>) target(%77 : memref<256xf32, #tpu.memory_space<vmem>>) target_semaphore(%79 : memref<!tpu.dma_semaphore, #tpu.memory_space<semaphore_mem>>)
    }
    %c0_i32_8 = arith.constant 0 : i32
    %9 = arith.subi %2, %c0_i32_8 : i32
    %c1_i32_9 = arith.constant 1 : i32
    %c1_i32_10 = arith.constant 1 : i32
    %10 = arith.subi %c1_i32_9, %c1_i32_10 : i32
    %11 = arith.addi %9, %10 : i32
    %c1_i32_11 = arith.constant 1 : i32
    %12 = arith.divsi %11, %c1_i32_11 : i32
    %c1_i32_12 = arith.constant 1 : i32
    %c0_i32_13 = arith.constant 0 : i32
    %c0_i32_14 = arith.constant 0 : i32
    %13 = arith.subi %12, %c0_i32_14 : i32
    %14 = arith.addi %c0_i32_14, %13 : i32
    %c1_i32_15 = arith.constant 1 : i32
    scf.for %arg13 = %c0_i32_14 to %14 step %c1_i32_15  : i32 {
      %60 = arith.muli %arg13, %c1_i32_12 : i32
      %61 = arith.addi %c0_i32_13, %60 : i32
      %c0_i32_38 = arith.constant 0 : i32
      %c0_i32_39 = arith.constant 0 : i32
      %c0_i32_40 = arith.constant 0 : i32
      %62 = tpu.memref_slice %arg3[%c0_i32_38, %c0_i32_40] : memref<10x256xf32, #tpu.memory_space<any>> -> memref<1x256xf32, #tpu.memory_space<any>>
      %63 = tpu.memref_squeeze %62 : memref<1x256xf32, #tpu.memory_space<any>> -> memref<256xf32, #tpu.memory_space<any>>
      %c0_i32_41 = arith.constant 0 : i32
      %64 = tpu.memref_slice %arg10[%61, %c0_i32_41] : memref<8x256xf32, #tpu.memory_space<vmem>> -> memref<1x256xf32, #tpu.memory_space<vmem>>
      %65 = tpu.memref_squeeze %64 : memref<1x256xf32, #tpu.memory_space<vmem>> -> memref<256xf32, #tpu.memory_space<vmem>>
      %66 = tpu.memref_slice %arg12[%c0_i32_39] : memref<2x!tpu.dma_semaphore, #tpu.memory_space<semaphore_mem>> -> memref<1x!tpu.dma_semaphore, #tpu.memory_space<semaphore_mem>>
      %67 = tpu.memref_squeeze %66 : memref<1x!tpu.dma_semaphore, #tpu.memory_space<semaphore_mem>> -> memref<!tpu.dma_semaphore, #tpu.memory_space<semaphore_mem>>
      tpu.wait_dma2 semaphore(%67 : memref<!tpu.dma_semaphore, #tpu.memory_space<semaphore_mem>>) src(%63 : memref<256xf32, #tpu.memory_space<any>>) dst(%65 : memref<256xf32, #tpu.memory_space<vmem>>)
      %c0_i32_42 = arith.constant 0 : i32
      %c1_i32_43 = arith.constant 1 : i32
      %c0_i32_44 = arith.constant 0 : i32
      %68 = tpu.memref_slice %arg4[%c0_i32_42, %c0_i32_44] : memref<12x256xf32, #tpu.memory_space<any>> -> memref<1x256xf32, #tpu.memory_space<any>>
      %69 = tpu.memref_squeeze %68 : memref<1x256xf32, #tpu.memory_space<any>> -> memref<256xf32, #tpu.memory_space<any>>
      %c0_i32_45 = arith.constant 0 : i32
      %70 = tpu.memref_slice %arg11[%61, %c0_i32_45] : memref<8x256xf32, #tpu.memory_space<vmem>> -> memref<1x256xf32, #tpu.memory_space<vmem>>
      %71 = tpu.memref_squeeze %70 : memref<1x256xf32, #tpu.memory_space<vmem>> -> memref<256xf32, #tpu.memory_space<vmem>>
      %72 = tpu.memref_slice %arg12[%c1_i32_43] : memref<2x!tpu.dma_semaphore, #tpu.memory_space<semaphore_mem>> -> memref<1x!tpu.dma_semaphore, #tpu.memory_space<semaphore_mem>>
      %73 = tpu.memref_squeeze %72 : memref<1x!tpu.dma_semaphore, #tpu.memory_space<semaphore_mem>> -> memref<!tpu.dma_semaphore, #tpu.memory_space<semaphore_mem>>
      tpu.wait_dma2 semaphore(%73 : memref<!tpu.dma_semaphore, #tpu.memory_space<semaphore_mem>>) src(%69 : memref<256xf32, #tpu.memory_space<any>>) dst(%71 : memref<256xf32, #tpu.memory_space<vmem>>)
    }
    %c0 = arith.constant 0 : index
    %c0_16 = arith.constant 0 : index
    %15 = vector.load %arg10[%c0, %c0_16] : memref<8x256xf32, #tpu.memory_space<vmem>>, vector<8x256xf32>
    %c0_17 = arith.constant 0 : index
    %c0_18 = arith.constant 0 : index
    %16 = vector.load %arg11[%c0_17, %c0_18] : memref<8x256xf32, #tpu.memory_space<vmem>>, vector<8x256xf32>
    %17 = arith.mulf %15, %15 : vector<8x256xf32>
    %cst = arith.constant dense<0.000000e+00> : vector<8xf32>
    %18 = vector.multi_reduction <add>, %17, %cst [1] : vector<8x256xf32> to vector<8xf32>
    %19 = vector.shape_cast %18 : vector<8xf32> to vector<8x1xf32>
    %cst_19 = arith.constant 1.000000e+00 : f32
    %20 = vector.broadcast %cst_19 : f32 to vector<8x1xf32>
    %21 = arith.cmpf ogt, %19, %20 : vector<8x1xf32>
    %22 = math.rsqrt %19 : vector<8x1xf32>
    %cst_20 = arith.constant 1.000000e+00 : f32
    %23 = vector.broadcast %cst_20 : f32 to vector<8x1xf32>
    %24 = arith.select %21, %22, %23 : vector<8x1xi1>, vector<8x1xf32>
    %25 = vector.broadcast %24 : vector<8x1xf32> to vector<8x256xf32>
    %26 = arith.mulf %15, %25 : vector<8x256xf32>
    %27 = arith.mulf %16, %16 : vector<8x256xf32>
    %cst_21 = arith.constant dense<0.000000e+00> : vector<8xf32>
    %28 = vector.multi_reduction <add>, %27, %cst_21 [1] : vector<8x256xf32> to vector<8xf32>
    %29 = vector.shape_cast %28 : vector<8xf32> to vector<8x1xf32>
    %cst_22 = arith.constant 1.000000e+00 : f32
    %30 = vector.broadcast %cst_22 : f32 to vector<8x1xf32>
    %31 = arith.cmpf ogt, %29, %30 : vector<8x1xf32>
    %32 = math.rsqrt %29 : vector<8x1xf32>
    %cst_23 = arith.constant 1.000000e+00 : f32
    %33 = vector.broadcast %cst_23 : f32 to vector<8x1xf32>
    %34 = arith.select %31, %32, %33 : vector<8x1xi1>, vector<8x1xf32>
    %35 = vector.broadcast %34 : vector<8x1xf32> to vector<8x256xf32>
    %36 = arith.mulf %16, %35 : vector<8x256xf32>
    %37 = arith.mulf %26, %36 : vector<8x256xf32>
    %38 = arith.truncf %37 : vector<8x256xf32> to vector<8x256xbf16>
    %c0_24 = arith.constant 0 : index
    %c0_25 = arith.constant 0 : index
    %39 = vector.load %arg5[%c0_24, %c0_25] : memref<256x128xbf16, #tpu.memory_space<vmem>>, vector<256x128xbf16>
    %cst_26 = arith.constant dense<0.000000e+00> : vector<8x128xf32>
    %40 = tpu.matmul %38, %39, %cst_26 {dimension_numbers = #tpu.dot_dimension_numbers<[1], [0], [0], [1], [0, 0, 1, 1], [], []>} : vector<8x256xbf16>, vector<256x128xbf16>, vector<8x128xf32> -> vector<8x128xf32>
    %c0_27 = arith.constant 0 : index
    %c0_28 = arith.constant 0 : index
    %41 = vector.load %arg6[%c0_27, %c0_28] : memref<1x128xf32, #tpu.memory_space<vmem>>, vector<1x128xf32>
    %42 = vector.broadcast %41 : vector<1x128xf32> to vector<8x128xf32>
    %43 = arith.addf %40, %42 : vector<8x128xf32>
    %cst_29 = arith.constant 0.000000e+00 : f32
    %44 = vector.broadcast %cst_29 : f32 to vector<8x128xf32>
    %45 = arith.maximumf %43, %44 : vector<8x128xf32>
    %c0_30 = arith.constant 0 : index
    %c0_31 = arith.constant 0 : index
    %46 = vector.load %arg7[%c0_30, %c0_31] : memref<1x128xf32, #tpu.memory_space<vmem>>, vector<1x128xf32>
    %47 = vector.broadcast %46 : vector<1x128xf32> to vector<8x128xf32>
    %48 = arith.mulf %45, %47 : vector<8x128xf32>
    %cst_32 = arith.constant dense<0.000000e+00> : vector<8xf32>
    %49 = vector.multi_reduction <add>, %48, %cst_32 [1] : vector<8x128xf32> to vector<8xf32>
    %50 = vector.shape_cast %49 : vector<8xf32> to vector<8x1xf32>
    %c0_33 = arith.constant 0 : index
    %c0_34 = arith.constant 0 : index
    %51 = memref.load %arg8[%c0_33, %c0_34] : memref<1x1xf32, #tpu.memory_space<smem>>
    %52 = vector.broadcast %51 : f32 to vector<8x1xf32>
    %53 = arith.addf %50, %52 : vector<8x1xf32>
    %54 = arith.negf %53 : vector<8x1xf32>
    %55 = math.exp %54 : vector<8x1xf32>
    %cst_35 = arith.constant 1.000000e+00 : f32
    %56 = vector.broadcast %cst_35 : f32 to vector<8x1xf32>
    %57 = arith.addf %56, %55 : vector<8x1xf32>
    %58 = arith.divf %56, %57 : vector<8x1xf32>
    %c0_36 = arith.constant 0 : index
    %c0_37 = arith.constant 0 : index
    %59 = vector.load %arg9[%c0_36, %c0_37] : memref<8x1xf32, #tpu.memory_space<vmem>>, vector<8x1xf32>
    tpu.vector_store %arg9[%c0_36, %c0_37], %58 {strides = array<i32>} : memref<8x1xf32, #tpu.memory_space<vmem>>, vector<8x1xf32>,
    return
  }
  func.func @transform_2(%arg0: i32, %arg1: memref<8xi32, #tpu.memory_space<smem>>, %arg2: memref<8xi32, #tpu.memory_space<smem>>) -> (i32, i32) {
    %c0_i32 = arith.constant 0 : i32
    %c0_i32_0 = arith.constant 0 : i32
    %c0_i32_1 = arith.constant 0 : i32
    return %c0_i32, %c0_i32_0 : i32, i32
  }
  func.func @transform_3(%arg0: i32, %arg1: memref<8xi32, #tpu.memory_space<smem>>, %arg2: memref<8xi32, #tpu.memory_space<smem>>) -> (i32, i32) {
    %c0_i32 = arith.constant 0 : i32
    %c0_i32_0 = arith.constant 0 : i32
    %c0_i32_1 = arith.constant 0 : i32
    return %c0_i32, %c0_i32_0 : i32, i32
  }
  func.func @transform_4(%arg0: i32, %arg1: memref<8xi32, #tpu.memory_space<smem>>, %arg2: memref<8xi32, #tpu.memory_space<smem>>) -> (i32, i32) {
    %c0_i32 = arith.constant 0 : i32
    %c0_i32_0 = arith.constant 0 : i32
    %c0_i32_1 = arith.constant 0 : i32
    return %c0_i32, %c0_i32_0 : i32, i32
  }
  func.func @transform_5(%arg0: i32, %arg1: memref<8xi32, #tpu.memory_space<smem>>, %arg2: memref<8xi32, #tpu.memory_space<smem>>) -> (i32, i32) {
    %c0_i32 = arith.constant 0 : i32
    %c0_i32_0 = arith.constant 0 : i32
    %c0_i32_1 = arith.constant 0 : i32
    return %c0_i32, %c0_i32_0 : i32, i32
  }
  func.func @transform_6(%arg0: i32, %arg1: memref<8xi32, #tpu.memory_space<smem>>, %arg2: memref<8xi32, #tpu.memory_space<smem>>) -> (i32, i32) {
    %c0_i32 = arith.constant 0 : i32
    %c0_i32_0 = arith.constant 0 : i32
    return %arg0, %c0_i32 : i32, i32
  }
}

</mosaic_0001>

<llo_original>
// kernel: tpu_custom_call.1
$region0: #{tpu_custom_call.1}
  #allocation0 [shape = 'u32[]', space=smem, size = 0x4, offset = 0x4, fixed_abs, tag = 'smem constant byte address 0x4 - core index']
  #allocation1 [shape = 'u32[144,128]{1,0:T(1,128)}', space=vmem, size = 0x12000, scoped, tag = 'internal scratch']
  #allocation2 [shape = 'f32[8,256]{1,0:T(8,128)}', space=vmem, size = 0x2000, scoped, tag = 'scratch operand']
  #allocation3 [shape = 'f32[8,256]{1,0:T(8,128)}', space=vmem, size = 0x2000, scoped, tag = 'scratch operand']
  #allocation4 [shape = 's32[2]{0}', space=sflag, size = 0x8, scoped, tag = 'scratch operand']
  #allocation5 [shape = 's32[1]{0}', space=sflag, size = 0x4, scoped, tag = 'scoped memory for tpu_custom_call.1']
  #allocation6 [shape = 'u8[512]{0}', space=smem, size = 0x200, scoped, tag = 'prefetched SMEM operand 0']
  #allocation7 [shape = 'u8[512]{0}', space=smem, size = 0x200, scoped, tag = 'prefetched SMEM operand 1']
  #allocation8 [shape = 'f32[1,1]{1,0:T(1,128)S(6)}', space=smem, size = 0x200, scoped, tag = 'scoped memory for tpu_custom_call.1']
  #allocation11 [shape = 's32[]', space=sflag, size = 0x4, offset = 0, fixed_abs, tag = 'sflag constant byte address 0x0 - dummy sync flag']
  #allocation12 [shape = 's32[]', space=sflag, size = 0x4, offset = 0, fixed_abs, tag = 'sflag constant byte address 0x0 - dummy sync flag']
  %s0 = inlined_call_operand.vmem [shape: s32[8], index: 0, kind: input, shape index: {}]
  %s1 = inlined_call_operand.vmem [shape: s32[8], index: 1, kind: input, shape index: {}]
  %s2 = inlined_call_operand.hbm [shape: f32[10,256], index: 2, kind: input, shape index: {}]
  %s3 = inlined_call_operand.hbm [shape: f32[12,256], index: 3, kind: input, shape index: {}]
  %s4 = inlined_call_operand.hbm [shape: bf16[256,128], index: 4, kind: input, shape index: {}]
  %s5 = inlined_call_operand.vmem [shape: f32[1,128], index: 5, kind: input, shape index: {}]
  %s6 = inlined_call_operand.vmem [shape: f32[1,128], index: 6, kind: input, shape index: {}]
  %s7 = inlined_call_operand.<no memory space> [shape: f32[1,1], index: 7, kind: input, shape index: {}]
  %s8 = inlined_call_operand.vmem [shape: f32[8,1], index: 8, kind: output, shape index: {}]
  %s9 = sld [smem:[#allocation0]]
  $region44: #{tpu_custom_call.1} parent=0
    _
  %s11 = ssub.s32 1, %s9
  %s12 = scalar_select 0, %s11, %s9
  %s13 = sshll.u32 %s0, 4
  %s14 = int_to_ptr.vmem [resolvable:$true] %s13
  %16 = dma.vmem_to_smem %s14, 16, [#allocation6], [#allocation5]
  %s17 = sshll.u32 %s1, 4
  %s18 = int_to_ptr.vmem [resolvable:$true] %s17
  %20 = dma.vmem_to_smem %s18, 16, [#allocation7], [#allocation5]
  %21 = sst [smem:[#allocation8]] %s7
  %22 = dma.done [#allocation5], 32
  %23 = sfence
  $region1: #{tpu_custom_call.1} parent=0
    #allocation9 [shape = 'u8[65536]{0}', space=vmem, size = 0x10000, scoped, tag = 'input window, operand 4, single buffered']
    #allocation10 [shape = 's32[1]{0}', space=sflag, size = 0x4, scoped, tag = 'scoped memory for tpu_custom_call.1']
    %24 = vsyncpa [#allocation10], 0
    // Predicated region
    $region2: #{tpu_custom_call.1} parent=1 // pred_check
      _
    $region3: #{tpu_custom_call.1} parent=1 // pred_check_branch
      %26 = sbr.rel (0) target = $region5
    $region4: #{tpu_custom_call.1} parent=1 // pred_region
      %s28 = ssub.s32 2048, 2048
      %29 = vsyncadd [#allocation10], %s28
      %s30 = sshll.u32 [#allocation9], 4
      %s31 = int_to_ptr.vmem [resolvable:$true] %s30
      %36 = dma.hbm_to_vmem [thread:$0]  %s4, 2048, %s31, [#allocation10], 64, 64, 4
    $region5: #{tpu_custom_call.1} parent=1 // pred_fallthru
      _
    // Predicated region
    $region6: #{tpu_custom_call.1} parent=1 // pred_check
      _
    $region7: #{tpu_custom_call.1} parent=1 // pred_check_branch
      %38 = sbr.rel (0) target = $region9
    $region8: #{tpu_custom_call.1} parent=1 // pred_region
      _
    $region9: #{tpu_custom_call.1} parent=1 // pred_fallthru
      _
    // Predicated region
    $region10: #{tpu_custom_call.1} parent=1 // pred_check
      _
    $region11: #{tpu_custom_call.1} parent=1 // pred_check_branch
      %40 = sbr.rel (0) target = $region13
    $region12: #{tpu_custom_call.1} parent=1 // pred_region
      _
    $region13: #{tpu_custom_call.1} parent=1 // pred_fallthru
      _
    // Predicated region
    $region14: #{tpu_custom_call.1} parent=1 // pred_check
      _
    $region15: #{tpu_custom_call.1} parent=1 // pred_check_branch
      %42 = sbr.rel (0) target = $region17
    $region16: #{tpu_custom_call.1} parent=1 // pred_region
      _
    $region17: #{tpu_custom_call.1} parent=1 // pred_fallthru
      _
    // Predicated region
    $region18: #{tpu_custom_call.1} parent=1 // pred_check
      _
    $region19: #{tpu_custom_call.1} parent=1 // pred_check_branch
      %44 = sbr.rel (0) target = $region21
    $region20: #{tpu_custom_call.1} parent=1 // pred_region
      %45 = dma.done [#allocation10], 2048
    $region21: #{tpu_custom_call.1} parent=1 // pred_fallthru
      _
    %s47 = smul.u32 0, 8
    %s48 = ssub.s32 8, %s47
    %p49 = scmp.lt.s32.totalorder %s48, 8
    %s50 = scalar_select %p49, %s48, 8
    // While loop
    $region22: #{tpu_custom_call.1} parent=1 // loop_pre_header
      _
    $region23: #{tpu_custom_call.1} parent=1 // loop_header
      %s52 = sphi 0, %s54
      %p53 = scmp.ge.s32.totalorder %s52, %s50
    $region24: #{tpu_custom_call.1} parent=1 // loop_header_branch
      %56 = sbr.rel (%p53) target = $region28
    $region25: #{tpu_custom_call.1} parent=1 // loop_body
      %s57 = sadd.s32 %s47, %s52
      %s58 = sld [smem:[#allocation6 + %s57]]
      %s59 = sld [smem:[#allocation7 + %s57]]
      %s60 = sshrl.u32 %s58, 3
      %s61 = sand.u32 %s58, 7
      %s62 = smul.u32 %s60, 16
      %s63 = sadd.s32 %s61, %s62
      %s64 = smul.addr %s63, 16
      %s65 = scalar_lea.hbm %s2, %s64
      %s66 = sshrl.u32 %s52, 3
      %s67 = sand.u32 %s52, 7
      %s68 = smul.u32 %s66, 16
      %s69 = sadd.s32 %s67, %s68
      %s70 = scalar_lea.vmem [#allocation2], %s69
      %s72 = sshll.u32 %s70, 4
      %s73 = int_to_ptr.vmem [resolvable:$true] %s72
      %75 = dma.hbm_to_vmem [thread:$0]  %s65, 32, %s73, [#allocation4], 128, 128, 1
      %s76 = sshrl.u32 %s59, 3
      %s77 = sand.u32 %s59, 7
      %s78 = smul.u32 %s76, 16
      %s79 = sadd.s32 %s77, %s78
      %s80 = smul.addr %s79, 16
      %s81 = scalar_lea.hbm %s3, %s80
      %s82 = scalar_lea.vmem [#allocation3], %s69
      %s83 = scalar_lea.sflag [#allocation4], 1
      %s85 = sshll.u32 %s82, 4
      %s86 = int_to_ptr.vmem [resolvable:$true] %s85
      %88 = dma.hbm_to_vmem [thread:$0]  %s81, 32, %s86, %s83, 128, 128, 1
    $region26: #{tpu_custom_call.1} parent=1 // loop_footer
      %s54 = sadd.s32 %s52, 1
    $region27: #{tpu_custom_call.1} parent=1 // loop_footer_branch
      %51 = sbr.rel target = $region23
    $region28: #{tpu_custom_call.1} parent=1 // loop_exit
      _
    // While loop
    $region29: #{tpu_custom_call.1} parent=1 // loop_pre_header
      _
    $region30: #{tpu_custom_call.1} parent=1 // loop_header
      %s90 = sphi 0, %s92
      %p91 = scmp.ge.s32.totalorder %s90, %s50
    $region31: #{tpu_custom_call.1} parent=1 // loop_header_branch
      %94 = sbr.rel (%p91) target = $region35
    $region32: #{tpu_custom_call.1} parent=1 // loop_body
      %96 = dma.done [#allocation4], 32
      %s97 = scalar_lea.sflag [#allocation4], 1
      %99 = dma.done %s97, 32
    $region33: #{tpu_custom_call.1} parent=1 // loop_footer
      %s92 = sadd.s32 %s90, 1
    $region34: #{tpu_custom_call.1} parent=1 // loop_footer_branch
      %89 = sbr.rel target = $region30
    $region35: #{tpu_custom_call.1} parent=1 // loop_exit
      _
    %v100 = vld [vmem:[#allocation2] sm:$0xff]
    %v101 = vld [vmem:[#allocation2 + $0x8] sm:$0xff]
    %v102 = vld [vmem:[#allocation3] sm:$0xff]
    %v103 = vld [vmem:[#allocation3 + $0x8] sm:$0xff]
    %v104 = vmul.f32 %v100, %v100
    %v105 = vmul.f32 %v101, %v101
    %v106 = vadd.f32 %v104, %v105
    %107 = vadd.xlane.f32.xlu0 %v106
    %v108 = vpop.xlane.xlu0 %107
    %vm109 = vcmp.gt.f32.partialorder %v108, 1.0
    %v110 = vrsqrt.pop %v108
    %v111 = vsel %vm109, %v110, 1.0
    %v112 = vmul.f32 %v100, %v111
    %v113 = vmul.f32 %v101, %v111
    %v114 = vmul.f32 %v102, %v102
    %v115 = vmul.f32 %v103, %v103
    %v116 = vadd.f32 %v114, %v115
    %117 = vadd.xlane.f32.xlu0 %v116
    %v118 = vpop.xlane.xlu0 %117
    %vm119 = vcmp.gt.f32.partialorder %v118, 1.0
    %v120 = vrsqrt.pop %v118
    %v121 = vsel %vm119, %v120, 1.0
    %v122 = vmul.f32 %v102, %v121
    %v123 = vmul.f32 %v103, %v121
    %v124 = vmul.f32 %v112, %v122
    %v125 = vmul.f32 %v113, %v123
    %v126 = vpack.c.bf16 %v124, %v124
    %v127 = vpack.c.bf16 %v125, %v125
    %v128 = vld [vmem:[#allocation9] sm:$0xf]
    %v129 = vld [vmem:[#allocation9 + $0x4] sm:$0xf]
    %v130 = vld [vmem:[#allocation9 + $0x8] sm:$0xf]
    %v131 = vld [vmem:[#allocation9 + $0xc] sm:$0xf]
    %v132 = vld [vmem:[#allocation9 + $0x10] sm:$0xf]
    %v133 = vld [vmem:[#allocation9 + $0x14] sm:$0xf]
    %v134 = vld [vmem:[#allocation9 + $0x18] sm:$0xf]
    %v135 = vld [vmem:[#allocation9 + $0x1c] sm:$0xf]
    %v136 = vld [vmem:[#allocation9 + $0x20] sm:$0xf]
    %v137 = vld [vmem:[#allocation9 + $0x24] sm:$0xf]
    %v138 = vld [vmem:[#allocation9 + $0x28] sm:$0xf]
    %v139 = vld [vmem:[#allocation9 + $0x2c] sm:$0xf]
    %v140 = vld [vmem:[#allocation9 + $0x30] sm:$0xf]
    %v141 = vld [vmem:[#allocation9 + $0x34] sm:$0xf]
    %v142 = vld [vmem:[#allocation9 + $0x38] sm:$0xf]
    %v143 = vld [vmem:[#allocation9 + $0x3c] sm:$0xf]
    %v144 = vld [vmem:[#allocation9 + $0x40] sm:$0xf]
    %v145 = vld [vmem:[#allocation9 + $0x44] sm:$0xf]
    %v146 = vld [vmem:[#allocation9 + $0x48] sm:$0xf]
    %v147 = vld [vmem:[#allocation9 + $0x4c] sm:$0xf]
    %v148 = vld [vmem:[#allocation9 + $0x50] sm:$0xf]
    %v149 = vld [vmem:[#allocation9 + $0x54] sm:$0xf]
    %v150 = vld [vmem:[#allocation9 + $0x58] sm:$0xf]
    %v151 = vld [vmem:[#allocation9 + $0x5c] sm:$0xf]
    %v152 = vld [vmem:[#allocation9 + $0x60] sm:$0xf]
    %v153 = vld [vmem:[#allocation9 + $0x64] sm:$0xf]
    %v154 = vld [vmem:[#allocation9 + $0x68] sm:$0xf]
    %v155 = vld [vmem:[#allocation9 + $0x6c] sm:$0xf]
    %v156 = vld [vmem:[#allocation9 + $0x70] sm:$0xf]
    %v157 = vld [vmem:[#allocation9 + $0x74] sm:$0xf]
    %v158 = vld [vmem:[#allocation9 + $0x78] sm:$0xf]
    %v159 = vld [vmem:[#allocation9 + $0x7c] sm:$0xf]
    %v160 = vld [vmem:[%s5] sm:$0x1]
    %v162 = vlaneseq
    %v163 = vshrl.u32 %v162, 7
    %v164 = vsub.s32 0, %v163
    %v165 = vrot.slane %v160, %v164
    %v199 = vunpack.c.l.b16 %v128
    %v200 = vunpack.c.l.b16 %v129
    %v201 = vunpack.c.l.b16 %v130
    %v202 = vunpack.c.l.b16 %v131
    %v203 = vunpack.c.l.b16 %v132
    %v204 = vunpack.c.l.b16 %v133
    %v205 = vunpack.c.l.b16 %v134
    %v206 = vunpack.c.l.b16 %v135
    %v207 = vunpack.c.l.b16 %v136
    %v208 = vunpack.c.l.b16 %v137
    %v209 = vunpack.c.l.b16 %v138
    %v210 = vunpack.c.l.b16 %v139
    %v211 = vunpack.c.l.b16 %v140
    %v212 = vunpack.c.l.b16 %v141
    %v213 = vunpack.c.l.b16 %v142
    %v214 = vunpack.c.l.b16 %v143
    %v215 = vunpack.c.l.b16 %v144
    %v216 = vunpack.c.l.b16 %v145
    %v217 = vunpack.c.l.b16 %v146
    %v218 = vunpack.c.l.b16 %v147
    %v219 = vunpack.c.l.b16 %v148
    %v220 = vunpack.c.l.b16 %v149
    %v221 = vunpack.c.l.b16 %v150
    %v222 = vunpack.c.l.b16 %v151
    %v223 = vunpack.c.l.b16 %v152
    %v224 = vunpack.c.l.b16 %v153
    %v225 = vunpack.c.l.b16 %v154
    %v226 = vunpack.c.l.b16 %v155
    %v227 = vunpack.c.l.b16 %v156
    %v228 = vunpack.c.l.b16 %v157
    %v229 = vunpack.c.l.b16 %v158
    %v230 = vunpack.c.l.b16 %v159
    %v231 = vpack.c.b16 %v200, %v199
    %v232 = vpack.c.b16 %v202, %v201
    %v233 = vpack.c.b16 %v204, %v203
    %v234 = vpack.c.b16 %v206, %v205
    %v235 = vpack.c.b16 %v208, %v207
    %v236 = vpack.c.b16 %v210, %v209
    %v237 = vpack.c.b16 %v212, %v211
    %v238 = vpack.c.b16 %v214, %v213
    %v239 = vpack.c.b16 %v216, %v215
    %v240 = vpack.c.b16 %v218, %v217
    %v241 = vpack.c.b16 %v220, %v219
    %v242 = vpack.c.b16 %v222, %v221
    %v243 = vpack.c.b16 %v224, %v223
    %v244 = vpack.c.b16 %v226, %v225
    %v245 = vpack.c.b16 %v228, %v227
    %v246 = vpack.c.b16 %v230, %v229
    %263 = vmatprep.subr.bf16.mxu0 0
    %264 = vmatpush1.bf16.msra.mxu0 %v238
    %265 = vmatprep.subr.bf16.mxu0 0
    %266 = vmatpush1.bf16.msra.mxu0 %v237
    %267 = vmatprep.subr.bf16.mxu0 0
    %268 = vmatpush1.bf16.msra.mxu0 %v236
    %269 = vmatprep.subr.bf16.mxu0 0
    %270 = vmatpush1.bf16.msra.mxu0 %v235
    %271 = vmatprep.subr.bf16.mxu0 0
    %272 = vmatpush1.bf16.msra.mxu0 %v234
    %273 = vmatprep.subr.bf16.mxu0 0
    %274 = vmatpush1.bf16.msra.mxu0 %v233
    %275 = vmatprep.subr.bf16.mxu0 0
    %276 = vmatpush1.bf16.msra.mxu0 %v232
    %277 = vmatprep.subr.bf16.mxu0 0
    %278 = vmatpush1.bf16.msra.mxu0 %v231
    %279 = vmatprep.subr.bf16.mxu0 0
    %280 = vmatpush2.bf16.msra.mxu0 %v246
    %281 = vmatprep.subr.bf16.mxu0 0
    %282 = vmatpush2.bf16.msra.mxu0 %v245
    %283 = vmatprep.subr.bf16.mxu0 0
    %284 = vmatpush2.bf16.msra.mxu0 %v244
    %285 = vmatprep.subr.bf16.mxu0 0
    %286 = vmatpush2.bf16.msra.mxu0 %v243
    %287 = vmatprep.subr.bf16.mxu0 0
    %288 = vmatpush2.bf16.msra.mxu0 %v242
    %289 = vmatprep.subr.bf16.mxu0 0
    %290 = vmatpush2.bf16.msra.mxu0 %v241
    %291 = vmatprep.subr.bf16.mxu0 0
    %292 = vmatpush2.bf16.msra.mxu0 %v240
    %293 = vmatprep.subr.bf16.mxu0 0
    %294 = vmatpush2.bf16.msra.mxu0 %v239
    %295 = vmatprep.mubr.bf16.mxu0 %v127
    %296 = vmatmul.mubr.bf16.gmra.mxu0 %v126
    %v297 = vpop.f32.mrf.mxu0
    %v298 = vadd.f32 %v165, %v297
    %v299 = vpop.f32.mrf.mxu0
    %v300 = vpop.f32.mrf.mxu0
    %v301 = vpop.f32.mrf.mxu0
    %302 = vdwg.mxu0
    %v303 = vmax.f32 %v298, 0.0
    %v304 = vld [vmem:[%s6] sm:$0x1]
    %v306 = vlaneseq
    %v307 = vshrl.u32 %v306, 7
    %v308 = vsub.s32 0, %v307
    %v309 = vrot.slane %v304, %v308
    %v311 = vmul.f32 %v303, %v309
    %312 = vadd.xlane.f32.xlu0 %v311
    %v313 = vpop.xlane.xlu0 %312
    %s314 = sld [smem:[#allocation8]]
    %v315 = vstv %s314
    %v316 = vadd.f32 %v313, %v315
    %v317 = vxor.u32 %v316, 2147483648
    %v318 = vmul.f32 %v317, 1.442695
    %v319 = vpow.pop %v318
    %v320 = vadd.f32 %v319, 1.0
    %v321 = vrcp.pop %v320
    %v322 = vmul.f32 1.0, %v321
    %vm323 = vcmask 7168
    %324 = vst.msk [vmem:[%s8] sm:$0xff] %vm323, %v322
    // Predicated region
    $region36: #{tpu_custom_call.1} parent=1 // pred_check
      _
    $region37: #{tpu_custom_call.1} parent=1 // pred_check_branch
      %326 = sbr.rel (0) target = $region39
    $region38: #{tpu_custom_call.1} parent=1 // pred_region
      _
    $region39: #{tpu_custom_call.1} parent=1 // pred_fallthru
      _
    // Predicated region
    $region40: #{tpu_custom_call.1} parent=1 // pred_check
      _
    $region41: #{tpu_custom_call.1} parent=1 // pred_check_branch
      %328 = sbr.rel (0) target = $region43
    $region42: #{tpu_custom_call.1} parent=1 // pred_region
      _
    $region43: #{tpu_custom_call.1} parent=1 // pred_fallthru
      _
    %329 = vsyncpa [#allocation10], 1
  %330 = vsyncmov [#allocation4]
  %s331 = vpop.sfrf %330
  %p332 = scmp.eq.s32.totalorder %s331, 0
  %p333 = pneg %p332
  %335 = shalt.err (%p333)
  %s336 = scalar_lea.sflag [#allocation4], 1
  %337 = vsyncmov %s336
  %s338 = vpop.sfrf %337
  %p339 = scmp.eq.s32.totalorder %s338, 0
  %p340 = pneg %p339
  %342 = shalt.err (%p340)

</llo_original>
